<compile_context>
chip_gen: v7x
topology: tpu7x:2x2x1
jax: 0.10.0
libtpu: 0.0.40
codegen_flags: <defaults>
</compile_context>

<pallas_src>
import functools

import jax
import jax.numpy as jnp
from jax import lax
from jax.experimental import pallas as pl
from jax.experimental.pallas import tpu as pltpu


def _convface_kernel(idx_ref, fea_ref, w_ref, shift_ref, out_ref, s_ref, *,
                     f_out, tile_f, kp1):
    """One (mesh, face-tile) block.

    idx_ref   : SMEM int32 [M * F_out * (K+1)]   scalar-prefetched indices
    fea_ref   : VMEM f32   [1, F_in, C_in]       channels-last features (per mesh)
    w_ref     : VMEM f32   [C_out, C_in]         conv weight with BN scale folded in
    shift_ref : VMEM f32   [C_out, 1]            folded conv bias + BN shift
    out_ref   : VMEM f32   [1, C_out, TF]        lane-dense output (faces on lanes)
    s_ref     : VMEM f32   [TF, C_in]            scratch: gathered + summed features
    """
    m = pl.program_id(0)
    ft = pl.program_id(1)
    base = (m * f_out + ft * tile_f) * kp1

    # Gather + neighbour sum: K+1 dynamic row slices per face along the sublane
    # axis, indices read as scalars from SMEM.  (Indices are assumed valid in
    # [0, F_in), same requirement as the PyTorch advanced-indexing gather.)
    def gather_one(f, carry):
        off = base + f * kp1
        acc = fea_ref[0, pl.ds(idx_ref[off], 1), :]          # [1, C_in]
        for j in range(1, kp1):                               # K is small: static unroll
            acc = acc + fea_ref[0, pl.ds(idx_ref[off + j], 1), :]
        s_ref[pl.ds(f, 1), :] = acc
        return carry

    lax.fori_loop(0, tile_f, gather_one, 0)

    # 1x1 conv (BN scale pre-folded into w) as a single MXU matmul contracting
    # C_in of both operands -> lane-dense [C_out, TF] block.
    y = lax.dot_general(
        w_ref[...], s_ref[...],
        dimension_numbers=(((1,), (1,)), ((), ())),
        preferred_element_type=jnp.float32)                   # [C_out, TF]
    y = y + shift_ref[...]                                    # broadcast over lanes
    out_ref[0, :, :] = jnp.maximum(y, 0.0).astype(out_ref.dtype)


def conv_face(fea, ring_n, pool_idx, w, b, gamma, beta, run_mean, run_var,
              eps=1e-5):
    """fea: [M, C_in, F_in] f32; ring_n: [M, F_out, K] int; pool_idx: [F_out] int or None.

    Returns [M, C_out, F_out] f32 (same NCL layout as the PyTorch module).
    """
    M, C_in, F_in = fea.shape
    _, F_out, K = ring_n.shape
    C_out = w.shape[0]
    KP1 = K + 1

    if pool_idx is None:
        pool_idx = jnp.arange(F_out, dtype=jnp.int32)
    center = jnp.broadcast_to(pool_idx.astype(jnp.int32)[None, :, None],
                              (M, F_out, 1))
    idx = jnp.concatenate([center, ring_n.astype(jnp.int32)], axis=2)  # [M,F_out,K+1]
    idx_flat = idx.reshape(-1)                                 # -> SMEM (scalar prefetch)

    # Channels-last per mesh so the per-face gather is a sublane (row) slice.
    fea_cl = jnp.transpose(fea, (0, 2, 1)).astype(jnp.float32)  # [M, F_in, C_in]

    # Fold BatchNorm (eval) + conv bias:  out = ReLU((scale*W) @ s + shift).
    scale = gamma / jnp.sqrt(run_var + eps)                     # [C_out]
    w_eff = (w.reshape(C_out, C_in) * scale[:, None]).astype(jnp.float32)
    shift = (beta + scale * (b - run_mean)).astype(jnp.float32)[:, None]  # [C_out,1]

    # Face tile: largest lane-aligned tile dividing F_out (full F_out for small
    # meshes).  Sized so double-buffered tiles fit v7x's 64 MiB VMEM.
    tile_f = F_out
    for cand in (512, 256, 128):
        if F_out % cand == 0:
            tile_f = cand
            break
    n_ft = F_out // tile_f

    # Rough VMEM budget (lane-padded) -> explicit scoped-VMEM limit.
    tile_bytes = (2 * F_in * max(C_in, 128) * 4        # fea slab, double-buffered
                  + 2 * max(C_out, 8) * max(tile_f, 128) * 4   # out tile, double-buffered
                  + max(tile_f, 8) * max(C_in, 128) * 4        # scratch
                  + 4 * max(C_out, 8) * 128 * 4)               # weight + shift
    vmem_limit = int(min(max(2 * tile_bytes, 8 << 20), 32 << 20))

    grid_spec = pltpu.PrefetchScalarGridSpec(
        num_scalar_prefetch=1,
        grid=(M, n_ft),
        in_specs=[
            # Full per-mesh feature slab; block index invariant along the face
            # axis, so it stays resident across face tiles of the same mesh.
            pl.BlockSpec((1, F_in, C_in), lambda m, f, idx_pref: (m, 0, 0)),
            pl.BlockSpec((C_out, C_in), lambda m, f, idx_pref: (0, 0)),
            pl.BlockSpec((C_out, 1), lambda m, f, idx_pref: (0, 0)),
        ],
        out_specs=pl.BlockSpec((1, C_out, tile_f),
                               lambda m, f, idx_pref: (m, 0, f)),
        scratch_shapes=[pltpu.VMEM((tile_f, C_in), jnp.float32)],
    )

    out = pl.pallas_call(
        functools.partial(_convface_kernel, f_out=F_out, tile_f=tile_f, kp1=KP1),
        grid_spec=grid_spec,
        out_shape=jax.ShapeDtypeStruct((M, C_out, F_out), jnp.float32),
        compiler_params=pltpu.CompilerParams(
            dimension_semantics=("parallel", "parallel"),
            vmem_limit_bytes=vmem_limit),
    )(idx_flat, fea_cl, w_eff, shift)
    return out


def ref_conv_face(fea, ring_n, pool_idx, w, b, gamma, beta, rm, rv, eps=1e-5):
    """Pure-JAX reference mirroring the PyTorch forward (BN eval mode)."""
    M, C, _ = fea.shape
    gathered = jax.vmap(lambda f, r: f[:, r])(fea, ring_n)              # [M, C, F_out, K]
    center = fea[:, :, pool_idx]                                        # [M, C, F_out]
    s = center + gathered.sum(-1)                                       # [M, C, F_out]
    z = jnp.einsum('oc,mcf->mof', w.reshape(w.shape[0], C), s) + b[None, :, None]
    zn = (gamma[None, :, None] * (z - rm[None, :, None])
          / jnp.sqrt(rv[None, :, None] + eps) + beta[None, :, None])
    return jnp.maximum(zn, 0.0)


if __name__ == "__main__":
    # Small shapes: 2 meshes, 4 in-channels, 8 out-channels, 16 faces pooled to
    # 8 output faces, 3-neighbour rings.
    M, C_in, C_out, F_in, F_out, K = 2, 4, 8, 16, 8, 3

    key = jax.random.PRNGKey(0)
    k_fea, k_ring, k_pool, k_w, k_b, k_g, k_be, k_rm, k_rv = jax.random.split(key, 9)

    fea = jax.random.normal(k_fea, (M, C_in, F_in), dtype=jnp.float32)
    ring_n = jax.random.randint(k_ring, (M, F_out, K), 0, F_in, dtype=jnp.int32)
    pool_idx = jax.random.permutation(k_pool, F_in)[:F_out].astype(jnp.int32)

    # Synthetic Conv1d (kernel size 1) weight + bias and BatchNorm parameters.
    w = 0.1 * jax.random.normal(k_w, (C_out, C_in, 1), dtype=jnp.float32)
    b = 0.1 * jax.random.normal(k_b, (C_out,), dtype=jnp.float32)
    gamma = 1.0 + 0.1 * jax.random.normal(k_g, (C_out,), dtype=jnp.float32)
    beta = 0.1 * jax.random.normal(k_be, (C_out,), dtype=jnp.float32)
    run_mean = 0.1 * jax.random.normal(k_rm, (C_out,), dtype=jnp.float32)
    run_var = 0.5 + jnp.abs(jax.random.normal(k_rv, (C_out,), dtype=jnp.float32))

    out = conv_face(fea, ring_n, pool_idx, w, b, gamma, beta, run_mean, run_var)
    out = jax.block_until_ready(out)

    ref = ref_conv_face(fea, ring_n, pool_idx, w, b, gamma, beta, run_mean, run_var)
    assert out.shape == (M, C_out, F_out)
    assert jnp.allclose(out, ref, rtol=1e-5, atol=1e-5), (
        f"max err {jnp.max(jnp.abs(out - ref))}")

    print("KERNEL_OK")
</pallas_src>

<mosaic_0001>
module attributes {stable_mosaic.version = 11 : i64} {
  func.func @_convface_kernel(%arg0: i32, %arg1: i32, %arg2: memref<64xi32, #tpu.memory_space<smem>>, %arg3: memref<1x16x4xf32, #tpu.memory_space<vmem>>, %arg4: memref<8x4xf32, #tpu.memory_space<vmem>>, %arg5: memref<8x1xf32, #tpu.memory_space<vmem>>, %arg6: memref<1x8x8xf32, #tpu.memory_space<vmem>>, %arg7: memref<8x4xf32, #tpu.memory_space<vmem>>) attributes {dimension_semantics = [#tpu.dimension_semantics<parallel>, #tpu.dimension_semantics<parallel>], iteration_bounds = array<i64: 2, 1>, scalar_prefetch = 1 : i64, scratch_operands = 1 : i64, tpu.core_type = #tpu.core_type<tc>, window_params = [{transform_indices = @transform_0, window_bounds = array<i64: 1, 16, 4>}, {pipeline_mode = #tpu.pipeline_mode<synchronous>, transform_indices = @transform_1, window_bounds = array<i64: 8, 4>}, {pipeline_mode = #tpu.pipeline_mode<synchronous>, transform_indices = @transform_2, window_bounds = array<i64: 8, 1>}, {transform_indices = @transform_3, window_bounds = array<i64: 1, 8, 8>}]} {
    %c8_i32 = arith.constant 8 : i32
    %0 = arith.muli %arg0, %c8_i32 : i32
    %c8_i32_0 = arith.constant 8 : i32
    %1 = arith.muli %arg1, %c8_i32_0 : i32
    %2 = arith.addi %0, %1 : i32
    %c4_i32 = arith.constant 4 : i32
    %3 = arith.muli %2, %c4_i32 : i32
    %c0_i32 = arith.constant 0 : i32
    %c8_i32_1 = arith.constant 8 : i32
    %4 = arith.addi %c0_i32, %c8_i32_1 : i32
    %c1_i32 = arith.constant 1 : i32
    scf.for %arg8 = %c0_i32 to %4 step %c1_i32  : i32 {
      %c4_i32_12 = arith.constant 4 : i32
      %16 = arith.muli %arg8, %c4_i32_12 : i32
      %17 = arith.addi %3, %16 : i32
      %18 = arith.index_cast %17 : i32 to index
      %19 = memref.load %arg2[%18] : memref<64xi32, #tpu.memory_space<smem>>
      %c0_13 = arith.constant 0 : index
      %20 = arith.index_cast %19 : i32 to index
      %c0_14 = arith.constant 0 : index
      %21 = vector.load %arg3[%c0_13, %20, %c0_14] : memref<1x16x4xf32, #tpu.memory_space<vmem>>, vector<1x1x4xf32>
      %22 = vector.shape_cast %21 : vector<1x1x4xf32> to vector<1x4xf32>
      %c1_i32_15 = arith.constant 1 : i32
      %23 = arith.addi %17, %c1_i32_15 : i32
      %24 = arith.index_cast %23 : i32 to index
      %25 = memref.load %arg2[%24] : memref<64xi32, #tpu.memory_space<smem>>
      %c0_16 = arith.constant 0 : index
      %26 = arith.index_cast %25 : i32 to index
      %c0_17 = arith.constant 0 : index
      %27 = vector.load %arg3[%c0_16, %26, %c0_17] : memref<1x16x4xf32, #tpu.memory_space<vmem>>, vector<1x1x4xf32>
      %28 = vector.shape_cast %27 : vector<1x1x4xf32> to vector<1x4xf32>
      %29 = arith.addf %22, %28 : vector<1x4xf32>
      %c2_i32 = arith.constant 2 : i32
      %30 = arith.addi %17, %c2_i32 : i32
      %31 = arith.index_cast %30 : i32 to index
      %32 = memref.load %arg2[%31] : memref<64xi32, #tpu.memory_space<smem>>
      %c0_18 = arith.constant 0 : index
      %33 = arith.index_cast %32 : i32 to index
      %c0_19 = arith.constant 0 : index
      %34 = vector.load %arg3[%c0_18, %33, %c0_19] : memref<1x16x4xf32, #tpu.memory_space<vmem>>, vector<1x1x4xf32>
      %35 = vector.shape_cast %34 : vector<1x1x4xf32> to vector<1x4xf32>
      %36 = arith.addf %29, %35 : vector<1x4xf32>
      %c3_i32 = arith.constant 3 : i32
      %37 = arith.addi %17, %c3_i32 : i32
      %38 = arith.index_cast %37 : i32 to index
      %39 = memref.load %arg2[%38] : memref<64xi32, #tpu.memory_space<smem>>
      %c0_20 = arith.constant 0 : index
      %40 = arith.index_cast %39 : i32 to index
      %c0_21 = arith.constant 0 : index
      %41 = vector.load %arg3[%c0_20, %40, %c0_21] : memref<1x16x4xf32, #tpu.memory_space<vmem>>, vector<1x1x4xf32>
      %42 = vector.shape_cast %41 : vector<1x1x4xf32> to vector<1x4xf32>
      %43 = arith.addf %36, %42 : vector<1x4xf32>
      %44 = arith.index_cast %arg8 : i32 to index
      %c0_22 = arith.constant 0 : index
      %45 = vector.load %arg7[%44, %c0_22] : memref<8x4xf32, #tpu.memory_space<vmem>>, vector<1x4xf32>
      tpu.vector_store %arg7[%44, %c0_22], %43 {strides = array<i32>} : memref<8x4xf32, #tpu.memory_space<vmem>>, vector<1x4xf32>,
    }
    %c8_i32_2 = arith.constant 8 : i32
    %c0 = arith.constant 0 : index
    %c0_3 = arith.constant 0 : index
    %5 = vector.load %arg4[%c0, %c0_3] : memref<8x4xf32, #tpu.memory_space<vmem>>, vector<8x4xf32>
    %c0_4 = arith.constant 0 : index
    %c0_5 = arith.constant 0 : index
    %6 = vector.load %arg7[%c0_4, %c0_5] : memref<8x4xf32, #tpu.memory_space<vmem>>, vector<8x4xf32>
    %cst = arith.constant dense<0.000000e+00> : vector<8x8xf32>
    %7 = tpu.matmul %5, %6, %cst {dimension_numbers = #tpu.dot_dimension_numbers<[1], [1], [0], [0], [0, 0, 1, 0], [], []>} : vector<8x4xf32>, vector<8x4xf32>, vector<8x8xf32> -> vector<8x8xf32>
    %c0_6 = arith.constant 0 : index
    %c0_7 = arith.constant 0 : index
    %8 = vector.load %arg5[%c0_6, %c0_7] : memref<8x1xf32, #tpu.memory_space<vmem>>, vector<8x1xf32>
    %9 = vector.broadcast %8 : vector<8x1xf32> to vector<8x8xf32>
    %10 = arith.addf %7, %9 : vector<8x8xf32>
    %cst_8 = arith.constant 0.000000e+00 : f32
    %11 = vector.broadcast %cst_8 : f32 to vector<8x8xf32>
    %12 = arith.maximumf %10, %11 : vector<8x8xf32>
    %c0_9 = arith.constant 0 : index
    %c0_10 = arith.constant 0 : index
    %c0_11 = arith.constant 0 : index
    %13 = vector.load %arg6[%c0_9, %c0_10, %c0_11] : memref<1x8x8xf32, #tpu.memory_space<vmem>>, vector<1x8x8xf32>
    %14 = vector.shape_cast %13 : vector<1x8x8xf32> to vector<8x8xf32>
    %15 = vector.shape_cast %12 : vector<8x8xf32> to vector<1x8x8xf32>
    tpu.vector_store %arg6[%c0_9, %c0_10, %c0_11], %15 {strides = array<i32>} : memref<1x8x8xf32, #tpu.memory_space<vmem>>, vector<1x8x8xf32>,
    return
  }
  func.func @transform_0(%arg0: i32, %arg1: i32, %arg2: memref<64xi32, #tpu.memory_space<smem>>) -> (i32, i32, i32) {
    %c0_i32 = arith.constant 0 : i32
    %c0_i32_0 = arith.constant 0 : i32
    %c0_i32_1 = arith.constant 0 : i32
    return %arg0, %c0_i32, %c0_i32_0 : i32, i32, i32
  }
  func.func @transform_1(%arg0: i32, %arg1: i32, %arg2: memref<64xi32, #tpu.memory_space<smem>>) -> (i32, i32) {
    %c0_i32 = arith.constant 0 : i32
    %c0_i32_0 = arith.constant 0 : i32
    %c0_i32_1 = arith.constant 0 : i32
    return %c0_i32, %c0_i32_0 : i32, i32
  }
  func.func @transform_2(%arg0: i32, %arg1: i32, %arg2: memref<64xi32, #tpu.memory_space<smem>>) -> (i32, i32) {
    %c0_i32 = arith.constant 0 : i32
    %c0_i32_0 = arith.constant 0 : i32
    %c0_i32_1 = arith.constant 0 : i32
    return %c0_i32, %c0_i32_0 : i32, i32
  }
  func.func @transform_3(%arg0: i32, %arg1: i32, %arg2: memref<64xi32, #tpu.memory_space<smem>>) -> (i32, i32, i32) {
    %c0_i32 = arith.constant 0 : i32
    %c0_i32_0 = arith.constant 0 : i32
    return %arg0, %c0_i32, %arg1 : i32, i32, i32
  }
}

</mosaic_0001>

<llo_original>
// kernel: tpu_custom_call.1
$region0: #{tpu_custom_call.1}
  #allocation0 [shape = 'u32[]', space=smem, size = 0x4, offset = 0x4, fixed_abs, tag = 'smem constant byte address 0x4 - core index']
  #allocation1 [shape = 'u32[144,128]{1,0:T(1,128)}', space=vmem, size = 0x12000, scoped, tag = 'internal scratch']
  #allocation2 [shape = 'f32[8,4]{1,0:T(8,128)}', space=vmem, size = 0x1000, scoped, tag = 'scratch operand']
  #allocation3 [shape = 's32[1]{0}', space=sflag, size = 0x4, scoped, tag = 'scoped memory for tpu_custom_call.1']
  #allocation4 [shape = 'u8[512]{0}', space=smem, size = 0x200, scoped, tag = 'prefetched SMEM operand 0']
  %s0 = inlined_call_operand.vmem [shape: s32[64], index: 0, kind: input, shape index: {}]
  %s1 = inlined_call_operand.vmem [shape: f32[2,16,4], index: 1, kind: input, shape index: {}]
  %s2 = inlined_call_operand.vmem [shape: f32[8,4], index: 2, kind: input, shape index: {}]
  %s3 = inlined_call_operand.vmem [shape: f32[8,1], index: 3, kind: input, shape index: {}]
  %s4 = inlined_call_operand.hbm [shape: f32[2,8,8], index: 4, kind: output, shape index: {}]
  %s5 = sld [smem:[#allocation0]]
  $region52: #{tpu_custom_call.1} parent=0
    _
  %s7 = ssub.s32 1, %s5
  %s8 = scalar_select 0, %s7, %s5
  %s9 = sshll.u32 %s0, 4
  %s10 = int_to_ptr.vmem [resolvable:$true] %s9
  %12 = dma.vmem_to_smem %s10, 16, [#allocation4], [#allocation3]
  %13 = dma.done [#allocation3], 16
  %14 = sfence
  $region1: #{tpu_custom_call.1} parent=0
    #allocation5 [shape = 'u8[8192]{0}', space=vmem, size = 0x2000, scoped, tag = 'output window, operand 0']
    #allocation6 [shape = 's32[2]{0}', space=sflag, size = 0x8, scoped, tag = 'scoped memory for tpu_custom_call.1']
    %15 = vsyncpa [#allocation6], 0
    %s16 = scalar_lea.sflag [#allocation6], 1
    %17 = vsyncpa %s16, 0
    loop: start=0, step=1, limit=4
    $region2: #{tpu_custom_call.1} parent=1 // loop_pre_header
      _
    $region3: #{tpu_custom_call.1} parent=1 // loop_header
      %s19 = sphi 0, %s23
      %p20 = scmp.ge.s32.totalorder %s19, 4
      %s26 = sphi 0, %s38
      %s27 = sphi 0, %s34
      %s28 = sphi 0, %s26
      %s29 = sphi 0, %s27
      %s30 = sphi 0, %s28
      %s31 = sphi 0, %s29
      %s41 = sphi 0, %s43
      %s44 = sphi 0, %s41
      %s45 = sphi 0, %s44
      %s61 = sphi 0, %s45
      %s65 = sphi 0, %s65
      %s67 = sphi 0, %s65
      %s68 = sphi 0, %s67
      %s82 = sphi 0, %s68
      %s86 = sphi 0, %s86
      %s88 = sphi 0, %s86
      %s89 = sphi 0, %s88
      %s103 = sphi 0, %s89
      %s111 = sphi 0, %s113
      %s114 = sphi 0, %s111
      %s115 = sphi 0, %s114
      %s131 = sphi 0, %s115
    $region4: #{tpu_custom_call.1} parent=1 // loop_header_branch
      %22 = sbr.rel (%p20) target = $region8
    $region5: #{tpu_custom_call.1} parent=1 // loop_body
      %s24 = ssub.s32 %s19, 1
      %s25 = ssub.s32 %s19, 2
      %s32 = sadd.s32 1, %s27
      %p33 = scmp.ge.s32.totalorder %s32, 1
      %s34 = scalar_select %p33, 0, %s32
      %s35 = sadd.s32 1, %s26
      %s36 = scalar_select %p33, %s35, %s26
      %p37 = scmp.ge.s32.totalorder %s36, 2
      %s38 = scalar_select %p37, 0, %s36
      %s39 = ssub.s32 %s26, %s38
      %p40 = scmp.eq.s32.totalorder %s39, 0
      %s42 = sadd.s32 %s41, 1
      %s43 = scalar_select %p40, %s41, %s42
      %p46 = pneg %p40
      %p47 = scmp.eq.s32.totalorder %s19, 1
      %p48 = por %p46, %p47
      %p49 = scmp.ne.s32.totalorder %s41, %s44
      %p50 = scmp.eq.s32.totalorder %s19, 0
      %p51 = por %p49, %p50
      %p52 = scmp.ne.s32.totalorder %s41, %s44
      %p53 = scmp.eq.s32.totalorder %s24, 1
      %p54 = por %p52, %p53
      %p55 = scmp.ne.s32.totalorder %s44, %s45
      %p56 = scmp.eq.s32.totalorder %s24, 0
      %p57 = por %p55, %p56
      %p58 = scmp.ne.s32.totalorder %s44, %s45
      %p59 = scmp.eq.s32.totalorder %s25, 1
      %p60 = por %p58, %p59
      %p62 = scmp.ne.s32.totalorder %s45, %s61
      %p63 = scmp.eq.s32.totalorder %s25, 0
      %p64 = por %p62, %p63
      %s66 = sadd.s32 %s65, 1
      %p69 = scmp.eq.s32.totalorder %s19, 1
      %p70 = scmp.ne.s32.totalorder %s65, %s67
      %p71 = scmp.eq.s32.totalorder %s19, 0
      %p72 = por %p70, %p71
      %p73 = scmp.ne.s32.totalorder %s65, %s67
      %p74 = scmp.eq.s32.totalorder %s24, 1
      %p75 = por %p73, %p74
      %p76 = scmp.ne.s32.totalorder %s67, %s68
      %p77 = scmp.eq.s32.totalorder %s24, 0
      %p78 = por %p76, %p77
      %p79 = scmp.ne.s32.totalorder %s67, %s68
      %p80 = scmp.eq.s32.totalorder %s25, 1
      %p81 = por %p79, %p80
      %p83 = scmp.ne.s32.totalorder %s68, %s82
      %p84 = scmp.eq.s32.totalorder %s25, 0
      %p85 = por %p83, %p84
      %s87 = sadd.s32 %s86, 1
      %p90 = scmp.eq.s32.totalorder %s19, 1
      %p91 = scmp.ne.s32.totalorder %s86, %s88
      %p92 = scmp.eq.s32.totalorder %s19, 0
      %p93 = por %p91, %p92
      %p94 = scmp.ne.s32.totalorder %s86, %s88
      %p95 = scmp.eq.s32.totalorder %s24, 1
      %p96 = por %p94, %p95
      %p97 = scmp.ne.s32.totalorder %s88, %s89
      %p98 = scmp.eq.s32.totalorder %s24, 0
      %p99 = por %p97, %p98
      %p100 = scmp.ne.s32.totalorder %s88, %s89
      %p101 = scmp.eq.s32.totalorder %s25, 1
      %p102 = por %p100, %p101
      %p104 = scmp.ne.s32.totalorder %s89, %s103
      %p105 = scmp.eq.s32.totalorder %s25, 0
      %p106 = por %p104, %p105
      %s107 = ssub.s32 %s26, %s38
      %s108 = ssub.s32 %s27, %s34
      %s109 = sor.u32 %s107, %s108
      %p110 = scmp.eq.s32.totalorder %s109, 0
      %s112 = sadd.s32 %s111, 1
      %s113 = scalar_select %p110, %s111, %s112
      %p116 = pneg %p110
      %p117 = scmp.eq.s32.totalorder %s19, 1
      %p118 = por %p116, %p117
      %p119 = scmp.ne.s32.totalorder %s111, %s114
      %p120 = scmp.eq.s32.totalorder %s19, 0
      %p121 = por %p119, %p120
      %p122 = scmp.ne.s32.totalorder %s111, %s114
      %p123 = scmp.eq.s32.totalorder %s24, 1
      %p124 = por %p122, %p123
      %p125 = scmp.ne.s32.totalorder %s114, %s115
      %p126 = scmp.eq.s32.totalorder %s24, 0
      %p127 = por %p125, %p126
      %p128 = scmp.ne.s32.totalorder %s114, %s115
      %p129 = scmp.eq.s32.totalorder %s25, 1
      %p130 = por %p128, %p129
      %p132 = scmp.ne.s32.totalorder %s115, %s131
      %p133 = scmp.eq.s32.totalorder %s25, 0
      %p134 = por %p132, %p133
      %p135 = scmp.le.s32.totalorder 1, %s19
      %p136 = scmp.lt.s32.totalorder %s19, 3
      %p137 = pnand %p135, %p136
      %p138 = pneg %p137
      // Predicated region
      $region9: #{tpu_custom_call.1} parent=5 // pred_check
        _
      $region10: #{tpu_custom_call.1} parent=5 // pred_check_branch
        %140 = sbr.rel (%p137) target = $region12
      $region11: #{tpu_custom_call.1} parent=5 // pred_region
        %s141 = ssub.s32 %s19, 1
        // Predicated region
        $region13: #{tpu_custom_call.1} parent=11 // pred_check
          %p142 = pneg %p78
        $region14: #{tpu_custom_call.1} parent=11 // pred_check_branch
          %144 = sbr.rel (%p142) target = $region16
        $region15: #{tpu_custom_call.1} parent=11 // pred_region
          _
        $region16: #{tpu_custom_call.1} parent=11 // pred_fallthru
          _
        // Predicated region
        $region17: #{tpu_custom_call.1} parent=11 // pred_check
          %p145 = pneg %p99
        $region18: #{tpu_custom_call.1} parent=11 // pred_check_branch
          %147 = sbr.rel (%p145) target = $region20
        $region19: #{tpu_custom_call.1} parent=11 // pred_region
          _
        $region20: #{tpu_custom_call.1} parent=11 // pred_fallthru
          _
      $region12: #{tpu_custom_call.1} parent=5 // pred_fallthru
        _
      %p148 = scmp.lt.s32.totalorder %s19, 2
      // Predicated region
      $region21: #{tpu_custom_call.1} parent=5 // pred_check
        %p149 = pneg %p148
      $region22: #{tpu_custom_call.1} parent=5 // pred_check_branch
        %151 = sbr.rel (%p149) target = $region24
      $region23: #{tpu_custom_call.1} parent=5 // pred_region
        // Predicated region
        $region25: #{tpu_custom_call.1} parent=23 // pred_check
          %p152 = pneg %p51
        $region26: #{tpu_custom_call.1} parent=23 // pred_check_branch
          %154 = sbr.rel (%p152) target = $region28
        $region27: #{tpu_custom_call.1} parent=23 // pred_region
          %p155 = scmp.lt.s32.totalorder %s26, 1
          %s156 = scalar_select %p155, %s26, 1
          %s157 = smul.addr %s156, 2
          %s158 = smul.addr %s157, 8
          %s159 = scalar_lea.vmem %s1, %s158
        $region28: #{tpu_custom_call.1} parent=23 // pred_fallthru
          _
      $region24: #{tpu_custom_call.1} parent=5 // pred_fallthru
        _
      %p160 = scmp.le.s32.totalorder 1, %s19
      %p161 = scmp.lt.s32.totalorder %s19, 3
      %p162 = pnand %p160, %p161
      %p163 = pneg %p162
      // Predicated region
      $region29: #{tpu_custom_call.1} parent=5 // pred_check
        _
      $region30: #{tpu_custom_call.1} parent=5 // pred_check_branch
        %165 = sbr.rel (%p162) target = $region32
      $region31: #{tpu_custom_call.1} parent=5 // pred_region
        %s166 = ssub.s32 %s19, 1
        %p167 = scmp.lt.s32.totalorder %s28, 1
        %s168 = scalar_select %p167, %s28, 1
        %s169 = smul.addr %s168, 2
        %s170 = smul.addr %s169, 8
        %s171 = scalar_lea.vmem %s1, %s170
        %p172 = pneg %p57
        %p173 = pneg %p54
        %p174 = pneg %p78
        %p175 = pneg %p75
        %p176 = pneg %p99
        %p177 = pneg %p96
        %p178 = pneg %p127
        %p179 = pneg %p124
        %s180 = sand.u32 %s114, 1
        %s181 = scalar_lea.sflag [#allocation6], %s180
        %s182 = sand.u32 %s114, 1
        %s183 = smul.addr %s182, 8
        %s184 = scalar_lea.vmem [#allocation5], %s183
        %p185 = scmp.lt.s32.totalorder %s28, 1
        %s186 = scalar_select %p185, %s28, 1
        %s187 = smul.addr %s186, 2
        %s188 = smul.addr %s187, 8
        %s189 = scalar_lea.vmem %s1, %s188
        %s190 = smul.u32 %s28, 8
        %s191 = smul.u32 %s29, 8
        %s192 = sadd.s32 %s190, %s191
        %s193 = smul.u32 %s192, 4
        loop: start=0, step=1, limit=8
        $region33: #{tpu_custom_call.1} parent=31 // loop_pre_header
          _
        $region34: #{tpu_custom_call.1} parent=31 // loop_header
          %s195 = sphi 0, %s199
          %p196 = scmp.ge.s32.totalorder %s195, 8
        $region35: #{tpu_custom_call.1} parent=31 // loop_header_branch
          %198 = sbr.rel (%p196) target = $region39
        $region36: #{tpu_custom_call.1} parent=31 // loop_body
          %s200 = smul.u32 %s195, 4
          %s201 = sadd.s32 %s193, %s200
          %s202 = sld [smem:[#allocation4 + %s201]]
          %s203 = scalar_lea.vmem %s189, %s202
          %v204 = vld [vmem:[%s203] sm:$0x1]
          %s205 = sadd.s32 %s201, 1
          %s206 = sld [smem:[#allocation4 + %s205]]
          %s207 = scalar_lea.vmem %s189, %s206
          %v208 = vld [vmem:[%s207] sm:$0x1]
          %v209 = vadd.f32 %v204, %v208
          %s210 = sadd.s32 %s201, 2
          %s211 = sld [smem:[#allocation4 + %s210]]
          %s212 = scalar_lea.vmem %s189, %s211
          %v213 = vld [vmem:[%s212] sm:$0x1]
          %v214 = vadd.f32 %v209, %v213
          %s215 = sadd.s32 %s201, 3
          %s216 = sld [smem:[#allocation4 + %s215]]
          %s217 = scalar_lea.vmem %s189, %s216
          %v218 = vld [vmem:[%s217] sm:$0x1]
          %v219 = vadd.f32 %v214, %v218
          %s220 = scalar_lea.vmem [#allocation2], %s195
          %vm221 = vcmask 24576
          %222 = vst.msk [vmem:[%s220] sm:$0x1] %vm221, %v219
        $region37: #{tpu_custom_call.1} parent=31 // loop_footer
          %s199 = sadd.s32 1, %s195
        $region38: #{tpu_custom_call.1} parent=31 // loop_footer_branch
          %194 = sbr.rel target = $region34
        $region39: #{tpu_custom_call.1} parent=31 // loop_exit
          _
        %v223 = vld [vmem:[%s2] sm:$0xff]
        %v224 = vld [vmem:[#allocation2] sm:$0xff]
        %v225 = vld [vmem:[%s3] sm:$0xff]
        %227 = vset.pattern.permute.xlu0 0
        %228 = vperm.xlu0 %227, %v225
        %v229 = vpop.permute.xlu0 %228
        %vm231 = vcmask 31744
        %v233 = vsel %vm231, %v223, 0
        %v236 = vsel %vm231, %v224, 0
        %238 = vmatprep.subr.mxu0 0.0
        %239 = vmatpush1.xpose.msra.mxu0 %v236
        %240 = vmatprep.subr.mxu0 0.0
        %241 = vmatpush1.xpose.msra.mxu0 0.0
        %242 = vmatprep.subr.mxu0 0.0
        %243 = vmatpush1.xpose.msra.mxu0 0.0
        %244 = vmatprep.subr.mxu0 0.0
        %245 = vmatpush1.xpose.msra.mxu0 0.0
        %246 = vmatprep.subr.mxu0 0.0
        %247 = vmatpush1.xpose.msra.mxu0 0.0
        %248 = vmatprep.subr.mxu0 0.0
        %249 = vmatpush1.xpose.msra.mxu0 0.0
        %250 = vmatprep.subr.mxu0 0.0
        %251 = vmatpush1.xpose.msra.mxu0 0.0
        %252 = vmatprep.subr.mxu0 0.0
        %253 = vmatpush1.xpose.msra.mxu0 0.0
        %254 = vmatprep.subr.mxu0 0.0
        %255 = vmatpush1.xpose.msra.mxu0 0.0
        %256 = vmatprep.subr.mxu0 0.0
        %257 = vmatpush1.xpose.msra.mxu0 0.0
        %258 = vmatprep.subr.mxu0 0.0
        %259 = vmatpush1.xpose.msra.mxu0 0.0
        %260 = vmatprep.subr.mxu0 0.0
        %261 = vmatpush1.xpose.msra.mxu0 0.0
        %262 = vmatprep.subr.mxu0 0.0
        %263 = vmatpush1.xpose.msra.mxu0 0.0
        %264 = vmatprep.subr.mxu0 0.0
        %265 = vmatpush1.xpose.msra.mxu0 0.0
        %266 = vmatprep.subr.mxu0 0.0
        %267 = vmatpush1.xpose.msra.mxu0 0.0
        %268 = vmatprep.subr.mxu0 0.0
        %269 = vmatpush1.xpose.msra.mxu0 0.0
        %270 = vmatprep.subr.mxu0 0.0
        %271 = vmatpush1.xpose.msra.mxu0 0.0
        %272 = vmatprep.subr.mxu0 0.0
        %273 = vmatpush1.xpose.msra.mxu0 0.0
        %274 = vmatprep.subr.mxu0 0.0
        %275 = vmatpush1.xpose.msra.mxu0 0.0
        %276 = vmatprep.subr.mxu0 0.0
        %277 = vmatpush1.xpose.msra.mxu0 0.0
        %278 = vmatprep.subr.mxu0 0.0
        %279 = vmatpush1.xpose.msra.mxu0 0.0
        %280 = vmatprep.subr.mxu0 0.0
        %281 = vmatpush1.xpose.msra.mxu0 0.0
        %282 = vmatprep.subr.mxu0 0.0
        %283 = vmatpush1.xpose.msra.mxu0 0.0
        %284 = vmatprep.subr.mxu0 0.0
        %285 = vmatpush1.xpose.msra.mxu0 0.0
        %286 = vmatprep.subr.mxu0 0.0
        %287 = vmatpush1.xpose.msra.mxu0 0.0
        %288 = vmatprep.subr.mxu0 0.0
        %289 = vmatpush1.xpose.msra.mxu0 0.0
        %290 = vmatprep.subr.mxu0 0.0
        %291 = vmatpush1.xpose.msra.mxu0 0.0
        %292 = vmatprep.subr.mxu0 0.0
        %293 = vmatpush1.xpose.msra.mxu0 0.0
        %294 = vmatprep.subr.mxu0 0.0
        %295 = vmatpush1.xpose.msra.mxu0 0.0
        %296 = vmatprep.subr.mxu0 0.0
        %297 = vmatpush1.xpose.msra.mxu0 0.0
        %298 = vmatprep.subr.mxu0 0.0
        %299 = vmatpush1.xpose.msra.mxu0 0.0
        %300 = vmatprep.subr.mxu0 0.0
        %301 = vmatpush1.xpose.msra.mxu0 0.0
        %302 = vmatprep.mubr.f32.mxu0 0.0
        %303 = vmatmul.mubr.f32.gmra.mrb[0].mxu0 %v233
        %v304 = vpop.f32.mrb[0].mxu0
        %v305 = vadd.f32 %v229, %v304
        %v306 = vpop.f32.mrb[0].mxu0
        %307 = vdwg.mxu0
        %v308 = vmax.f32 %v305, 0.0
        %vm309 = vcmask 64512
        %310 = vst.msk [vmem:[%s184] sm:$0xff] %vm309, %v308
        %s311 = sand.u32 %s114, 1
        %s312 = scalar_lea.sflag [#allocation6], %s311
        %s313 = sand.u32 %s114, 1
        %s314 = smul.addr %s313, 8
        %s315 = scalar_lea.vmem [#allocation5], %s314
        // Predicated region
        $region40: #{tpu_custom_call.1} parent=31 // pred_check
          %p316 = pneg %p124
        $region41: #{tpu_custom_call.1} parent=31 // pred_check_branch
          %318 = sbr.rel (%p316) target = $region43
        $region42: #{tpu_custom_call.1} parent=31 // pred_region
          %s320 = ssub.s32 128, 128
          %321 = vsyncadd %s312, %s320
          %s322 = sadd.s32 %s29, %s28
          %s323 = smul.addr %s322, 128
          %s324 = scalar_lea.hbm %s4, %s323
          %s326 = sshll.u32 %s315, 4
          %s327 = int_to_ptr.vmem [resolvable:$true] %s326
          %329 = dma.vmem_to_hbm [thread:$0]  %s327, 128, %s324, %s312
        $region43: #{tpu_custom_call.1} parent=31 // pred_fallthru
          _
      $region32: #{tpu_custom_call.1} parent=5 // pred_fallthru
        _
      %p330 = scmp.le.s32.totalorder 2, %s19
      // Predicated region
      $region44: #{tpu_custom_call.1} parent=5 // pred_check
        %p331 = pneg %p330
      $region45: #{tpu_custom_call.1} parent=5 // pred_check_branch
        %333 = sbr.rel (%p331) target = $region47
      $region46: #{tpu_custom_call.1} parent=5 // pred_region
        %s334 = ssub.s32 %s19, 2
        // Predicated region
        $region48: #{tpu_custom_call.1} parent=46 // pred_check
          %p335 = pneg %p130
        $region49: #{tpu_custom_call.1} parent=46 // pred_check_branch
          %337 = sbr.rel (%p335) target = $region51
        $region50: #{tpu_custom_call.1} parent=46 // pred_region
          %s338 = sand.u32 %s115, 1
          %s339 = scalar_lea.sflag [#allocation6], %s338
          %s340 = sand.u32 %s115, 1
          %s341 = smul.addr %s340, 8
          %s342 = scalar_lea.vmem [#allocation5], %s341
          %343 = dma.done %s339, 128
        $region51: #{tpu_custom_call.1} parent=46 // pred_fallthru
          _
      $region47: #{tpu_custom_call.1} parent=5 // pred_fallthru
        _
    $region6: #{tpu_custom_call.1} parent=1 // loop_footer
      %s23 = sadd.s32 1, %s19
    $region7: #{tpu_custom_call.1} parent=1 // loop_footer_branch
      %18 = sbr.rel target = $region3
    $region8: #{tpu_custom_call.1} parent=1 // loop_exit
      _
    %344 = vsyncpa [#allocation6], 1
    %s345 = scalar_lea.sflag [#allocation6], 1
    %346 = vsyncpa %s345, 1

</llo_original>
